<compile_context>
chip_gen: v7x
topology: tpu7x:2x2x1
jax: 0.10.0
libtpu: 0.0.40
codegen_flags: <defaults>
</compile_context>

<pallas_src>
import functools

import jax
import jax.numpy as jnp
from jax.experimental import pallas as pl
from jax.experimental.pallas import tpu as pltpu

LANE = 128
_TARGET_TILE_B = 512                     # ~85% of HBM roofline per measurements
_VMEM_LIMIT_CAP = 48 * 1024 * 1024       # scoped-VMEM limit we request
_VMEM_TILING_CAP = 40 * 1024 * 1024      # what the tiles must fit into


def _round_up(n, m):
    return (n + m - 1) // m * m


def _vmem_caps():
    """(tiling_budget, vmem_limit) adapted to the local chip's physical VMEM."""
    cap = 64 * 1024 * 1024               # conservative fallback (v7x per-TC)
    try:
        cap = int(pltpu.get_tpu_info().vmem_capacity_bytes)
    except Exception:
        pass
    tiling = min(_VMEM_TILING_CAP, cap * 5 // 8)
    limit = min(_VMEM_LIMIT_CAP, cap * 3 // 4)
    return tiling, limit


def _choose_tile_b(B, F, n_pad, latentD, x_itemsize, w_itemsize, budget):
    """Largest batch tile (multiple of 8, <= target) whose buffers fit `budget`."""
    b_min = _round_up(max(B, 8), 8)
    # Resident (not batch-tiled) buffers: single-buffered weights + bias + slack.
    resident = F * n_pad * w_itemsize + n_pad * 4 + (2 << 20)
    # Per batch row: double-buffered x, double-buffered loc+scale, f32 matmul slab.
    per_row = 2 * F * x_itemsize + 2 * 2 * latentD * 4 + n_pad * 4
    avail = max(budget - resident, 8 * per_row)
    t_max = max(8, (avail // per_row) // 8 * 8)
    tile_b = max(8, min(_TARGET_TILE_B, t_max, b_min))
    # v7x has 2 TensorCores: make sure a big-enough batch yields >= 2 grid steps
    # so the "parallel" axis can actually be sharded (free on v5e/v6e).
    if tile_b >= b_min and b_min >= 16:
        tile_b = _round_up(pl.cdiv(b_min, 2), 8)
    return tile_b


def _resident_spec(block_shape):
    """BlockSpec for a grid-constant operand (weights / bias).

    Single-buffered when the installed JAX supports pipeline_mode (its block
    index never changes, so double-buffering only wastes VMEM)."""
    idx = lambda i: (0, 0)
    try:
        return pl.BlockSpec(block_shape, idx, pipeline_mode=pl.Buffered(1))
    except (AttributeError, TypeError):
        return pl.BlockSpec(block_shape, idx)


def _fused_decoder_kernel(x_ref, w_ref, b_ref, loc_ref, scale_ref, *, latentD, d_pad):
    # One fused MXU matmul over the concatenated [mu | logvar] columns.  Each
    # half starts on a 128-lane boundary, so the slices below need no rotation.
    pre = jnp.dot(x_ref[...], w_ref[...], preferred_element_type=jnp.float32)
    pre = pre + b_ref[...]                              # bias add in f32, (1, Npad) broadcast

    loc = pre[:, :latentD]                              # mu columns
    lv = pre[:, d_pad:d_pad + latentD]                  # logvar columns (lane-aligned start)

    # Numerically-stable softplus, only on the logvar columns (EUP slot).
    sp = jnp.maximum(lv, 0.0) + jnp.log1p(jnp.exp(-jnp.abs(lv)))
    # Guarantee Normal's scale > 0 invariant even if softplus flushes to zero;
    # clamping at float32 tiny changes no representable non-underflowed value.
    sp = jnp.maximum(sp, jnp.finfo(jnp.float32).tiny)

    loc_ref[...] = loc.astype(loc_ref.dtype)
    scale_ref[...] = sp.astype(scale_ref.dtype)


def prepare_params(w_mu, b_mu, w_logvar, b_logvar, *, dtype=jnp.bfloat16):
    """One-time param prep (outside the hot path): fuse, transpose, lane-pad.

    w_*: (D, F) PyTorch layout, b_*: (D,).
    Returns w_fused (F, 2*Dpad) in `dtype` and b_fused (1, 2*Dpad) in f32,
    where Dpad = round_up(D, 128) so both halves are lane-aligned.
    """
    D, F = w_mu.shape
    d_pad = _round_up(D, LANE)
    n_pad = 2 * d_pad
    w = jnp.zeros((F, n_pad), dtype)
    w = w.at[:, :D].set(w_mu.T.astype(dtype))
    w = w.at[:, d_pad:d_pad + D].set(w_logvar.T.astype(dtype))
    b = jnp.zeros((1, n_pad), jnp.float32)
    b = b.at[0, :D].set(b_mu.astype(jnp.float32))
    b = b.at[0, d_pad:d_pad + D].set(b_logvar.astype(jnp.float32))
    return w, b


@functools.partial(jax.jit, static_argnames=("latentD",))
def normal_dist_decoder_fused(x, w_fused, b_fused, *, latentD):
    """x: (B, F). w_fused: (F, 2*Dpad), b_fused: (1, 2*Dpad) from prepare_params."""
    B, F = x.shape
    n_pad = w_fused.shape[1]
    d_pad = n_pad // 2
    out_dtype = x.dtype

    # bf16 inputs halve the dominant x DMA traffic; accumulation stays f32.
    x = x.astype(w_fused.dtype)

    tiling_budget, vmem_limit = _vmem_caps()
    tile_b = _choose_tile_b(B, F, n_pad, latentD,
                            jnp.dtype(x.dtype).itemsize,
                            jnp.dtype(w_fused.dtype).itemsize,
                            tiling_budget)
    n_tiles = pl.cdiv(B, tile_b)
    b_pad = n_tiles * tile_b
    if b_pad != B:
        # Pad the batch up to a multiple of the tile; pad rows sliced off below.
        x = jnp.pad(x, ((0, b_pad - B), (0, 0)))

    out_isz = jnp.dtype(out_dtype).itemsize
    cost = pl.CostEstimate(
        flops=2 * b_pad * F * n_pad,
        transcendentals=2 * b_pad * latentD,                 # exp + log1p per scale elem
        bytes_accessed=(b_pad * F * jnp.dtype(x.dtype).itemsize
                        + F * n_pad * jnp.dtype(w_fused.dtype).itemsize
                        + n_pad * 4
                        + 2 * b_pad * latentD * out_isz),
    )

    kernel = functools.partial(_fused_decoder_kernel, latentD=latentD, d_pad=d_pad)
    loc, scale = pl.pallas_call(
        kernel,
        out_shape=(jax.ShapeDtypeStruct((b_pad, latentD), out_dtype),
                   jax.ShapeDtypeStruct((b_pad, latentD), out_dtype)),
        grid=(n_tiles,),
        in_specs=[
            pl.BlockSpec((tile_b, F), lambda i: (i, 0)),     # x: tiled over batch
            _resident_spec((F, n_pad)),                      # fused weight: VMEM-resident
            _resident_spec((1, n_pad)),                      # fused bias:   VMEM-resident
        ],
        out_specs=(
            pl.BlockSpec((tile_b, latentD), lambda i: (i, 0)),   # loc
            pl.BlockSpec((tile_b, latentD), lambda i: (i, 0)),   # scale
        ),
        compiler_params=pltpu.CompilerParams(
            dimension_semantics=("parallel",),               # shard batch tiles (v7x 2 TCs)
            vmem_limit_bytes=vmem_limit,
        ),
        cost_estimate=cost,
    )(x, w_fused, b_fused)

    if b_pad != B:
        loc, scale = loc[:B], scale[:B]
    return loc, scale


def normal_dist_decoder(x, w_mu, b_mu, w_logvar, b_logvar):
    """Convenience wrapper matching the PyTorch module's parameter layout."""
    w_fused, b_fused = prepare_params(w_mu, b_mu, w_logvar, b_logvar)
    return normal_dist_decoder_fused(x, w_fused, b_fused, latentD=w_mu.shape[0])


def _reference(x, w_mu, b_mu, w_logvar, b_logvar):
    loc = x @ w_mu.T + b_mu
    pre = x @ w_logvar.T + b_logvar
    return loc, jax.nn.softplus(pre)


if __name__ == "__main__":
    # TODO(synk): torch.distributions.Normal object construction has no Pallas
    # equivalent; the kernel returns (loc, scale) which parameterize it.
    B, num_feat_in, latentD = 8, 32, 16

    key = jax.random.PRNGKey(0)
    kx, kwm, kbm, kwl, kbl = jax.random.split(key, 5)

    # Deterministic init mimicking nn.Linear: U(-1/sqrt(fan_in), 1/sqrt(fan_in)).
    bound = 1.0 / jnp.sqrt(num_feat_in)
    x = jax.random.normal(kx, (B, num_feat_in), dtype=jnp.float32)
    w_mu = jax.random.uniform(kwm, (latentD, num_feat_in), jnp.float32, -bound, bound)
    b_mu = jax.random.uniform(kbm, (latentD,), jnp.float32, -bound, bound)
    w_logvar = jax.random.uniform(kwl, (latentD, num_feat_in), jnp.float32, -bound, bound)
    b_logvar = jax.random.uniform(kbl, (latentD,), jnp.float32, -bound, bound)

    # Params fused / transposed / lane-padded once (outside the per-call hot path).
    w_fused, b_fused = prepare_params(w_mu, b_mu, w_logvar, b_logvar)

    loc, scale = normal_dist_decoder_fused(x, w_fused, b_fused, latentD=latentD)
    jax.block_until_ready((loc, scale))

    # Tight check: reference using the same bf16 rounding of x / weights
    # (products are exact in f32, so this isolates the kernel's math).
    xr = x.astype(jnp.bfloat16).astype(jnp.float32)
    wmr = w_mu.astype(jnp.bfloat16).astype(jnp.float32)
    wlr = w_logvar.astype(jnp.bfloat16).astype(jnp.float32)
    loc_r, scale_r = _reference(xr, wmr, b_mu, wlr, b_logvar)
    assert jnp.allclose(loc, loc_r, atol=1e-4, rtol=1e-4)
    assert jnp.allclose(scale, scale_r, atol=1e-4, rtol=1e-4)

    # Loose check against the full-f32 PyTorch-equivalent reference.
    loc_f, scale_f = _reference(x, w_mu, b_mu, w_logvar, b_logvar)
    assert jnp.allclose(loc, loc_f, atol=3e-2, rtol=3e-2)
    assert jnp.allclose(scale, scale_f, atol=3e-2, rtol=3e-2)
    assert bool(jnp.all(scale > 0))

    print("KERNEL_OK")
</pallas_src>

<mosaic_0001>
module attributes {stable_mosaic.version = 11 : i64} {
  func.func @_fused_decoder_kernel(%arg0: i32, %arg1: memref<8x32xbf16, #tpu.memory_space<vmem>>, %arg2: memref<32x256xbf16, #tpu.memory_space<vmem>>, %arg3: memref<1x256xf32, #tpu.memory_space<vmem>>, %arg4: memref<8x16xf32, #tpu.memory_space<vmem>>, %arg5: memref<8x16xf32, #tpu.memory_space<vmem>>) attributes {dimension_semantics = [#tpu.dimension_semantics<parallel>], iteration_bounds = array<i64: 1>, scalar_prefetch = 0 : i64, scratch_operands = 0 : i64, tpu.core_type = #tpu.core_type<tc>, window_params = [{transform_indices = @transform_0, window_bounds = array<i64: 8, 32>}, {pipeline_mode = #tpu.pipeline_mode<synchronous>, transform_indices = @transform_1, window_bounds = array<i64: 32, 256>}, {pipeline_mode = #tpu.pipeline_mode<synchronous>, transform_indices = @transform_2, window_bounds = array<i64: 1, 256>}, {transform_indices = @transform_3, window_bounds = array<i64: 8, 16>}, {transform_indices = @transform_4, window_bounds = array<i64: 8, 16>}]} {
    %c0 = arith.constant 0 : index
    %c0_0 = arith.constant 0 : index
    %0 = vector.load %arg1[%c0, %c0_0] : memref<8x32xbf16, #tpu.memory_space<vmem>>, vector<8x32xbf16>
    %c0_1 = arith.constant 0 : index
    %c0_2 = arith.constant 0 : index
    %1 = vector.load %arg2[%c0_1, %c0_2] : memref<32x256xbf16, #tpu.memory_space<vmem>>, vector<32x256xbf16>
    %cst = arith.constant dense<0.000000e+00> : vector<8x256xf32>
    %2 = tpu.matmul %0, %1, %cst {dimension_numbers = #tpu.dot_dimension_numbers<[1], [0], [0], [1], [0, 0, 1, 1], [], []>} : vector<8x32xbf16>, vector<32x256xbf16>, vector<8x256xf32> -> vector<8x256xf32>
    %c0_3 = arith.constant 0 : index
    %c0_4 = arith.constant 0 : index
    %3 = vector.load %arg3[%c0_3, %c0_4] : memref<1x256xf32, #tpu.memory_space<vmem>>, vector<1x256xf32>
    %4 = vector.broadcast %3 : vector<1x256xf32> to vector<8x256xf32>
    %5 = arith.addf %2, %4 : vector<8x256xf32>
    %6 = vector.extract_strided_slice %5 {offsets = [0, 0], sizes = [8, 16], strides = [1, 1]} : vector<8x256xf32> to vector<8x16xf32>
    %7 = vector.extract_strided_slice %5 {offsets = [0, 128], sizes = [8, 16], strides = [1, 1]} : vector<8x256xf32> to vector<8x16xf32>
    %cst_5 = arith.constant 0.000000e+00 : f32
    %8 = vector.broadcast %cst_5 : f32 to vector<8x16xf32>
    %9 = arith.maximumf %7, %8 : vector<8x16xf32>
    %10 = math.absf %7 : vector<8x16xf32>
    %cst_6 = arith.constant 0.000000e+00 : f32
    %11 = vector.broadcast %cst_6 : f32 to vector<8x16xf32>
    %12 = arith.subf %11, %10 : vector<8x16xf32>
    %13 = math.exp %12 : vector<8x16xf32>
    %14 = math.log1p %13 : vector<8x16xf32>
    %15 = arith.addf %9, %14 : vector<8x16xf32>
    %cst_7 = arith.constant 1.17549435E-38 : f32
    %16 = vector.broadcast %cst_7 : f32 to vector<8x16xf32>
    %17 = arith.maximumf %15, %16 : vector<8x16xf32>
    %c0_8 = arith.constant 0 : index
    %c0_9 = arith.constant 0 : index
    %18 = vector.load %arg4[%c0_8, %c0_9] : memref<8x16xf32, #tpu.memory_space<vmem>>, vector<8x16xf32>
    tpu.vector_store %arg4[%c0_8, %c0_9], %6 {strides = array<i32>} : memref<8x16xf32, #tpu.memory_space<vmem>>, vector<8x16xf32>,
    %c0_10 = arith.constant 0 : index
    %c0_11 = arith.constant 0 : index
    %19 = vector.load %arg5[%c0_10, %c0_11] : memref<8x16xf32, #tpu.memory_space<vmem>>, vector<8x16xf32>
    tpu.vector_store %arg5[%c0_10, %c0_11], %17 {strides = array<i32>} : memref<8x16xf32, #tpu.memory_space<vmem>>, vector<8x16xf32>,
    return
  }
  func.func @transform_0(%arg0: i32) -> (i32, i32) {
    %c0_i32 = arith.constant 0 : i32
    %c0_i32_0 = arith.constant 0 : i32
    return %arg0, %c0_i32 : i32, i32
  }
  func.func @transform_1(%arg0: i32) -> (i32, i32) {
    %c0_i32 = arith.constant 0 : i32
    %c0_i32_0 = arith.constant 0 : i32
    %c0_i32_1 = arith.constant 0 : i32
    return %c0_i32, %c0_i32_0 : i32, i32
  }
  func.func @transform_2(%arg0: i32) -> (i32, i32) {
    %c0_i32 = arith.constant 0 : i32
    %c0_i32_0 = arith.constant 0 : i32
    %c0_i32_1 = arith.constant 0 : i32
    return %c0_i32, %c0_i32_0 : i32, i32
  }
  func.func @transform_3(%arg0: i32) -> (i32, i32) {
    %c0_i32 = arith.constant 0 : i32
    %c0_i32_0 = arith.constant 0 : i32
    return %arg0, %c0_i32 : i32, i32
  }
  func.func @transform_4(%arg0: i32) -> (i32, i32) {
    %c0_i32 = arith.constant 0 : i32
    %c0_i32_0 = arith.constant 0 : i32
    return %arg0, %c0_i32 : i32, i32
  }
}

</mosaic_0001>

<llo_original>
// kernel: normal_dist_decoder_fused.1
$region0: #{normal_dist_decoder_fused.1}
  #allocation0 [shape = 'u32[]', space=smem, size = 0x4, offset = 0x4, fixed_abs, tag = 'smem constant byte address 0x4 - core index']
  #allocation1 [shape = 'u32[144,128]{1,0:T(1,128)}', space=vmem, size = 0x12000, scoped, tag = 'internal scratch']
  %s0 = inlined_call_operand.vmem [shape: bf16[8,32], index: 0, kind: input, shape index: {}]
  %s1 = inlined_call_operand.hbm [shape: bf16[32,256], index: 1, kind: input, shape index: {}]
  %s2 = inlined_call_operand.vmem [shape: f32[1,256], index: 2, kind: input, shape index: {}]
  %s3 = inlined_call_operand.hbm [shape: f32[8,16], index: 3, kind: output, shape index: {0}]
  %s4 = inlined_call_operand.hbm [shape: f32[8,16], index: 4, kind: output, shape index: {1}]
  %5 = xla_tuple %s3, %s4
  %s6 = sld [smem:[#allocation0]]
  $region34: #{normal_dist_decoder_fused.1} parent=0
    _
  %s8 = ssub.s32 1, %s6
  %s9 = scalar_select 0, %s8, %s6
  $region1: #{normal_dist_decoder_fused.1} parent=0
    #allocation2 [shape = 'u8[16384]{0}', space=vmem, size = 0x4000, scoped, tag = 'input window, operand 1, single buffered']
    #allocation3 [shape = 's32[1]{0}', space=sflag, size = 0x4, scoped, tag = 'scoped memory for normal_dist_decoder_fused.1']
    #allocation4 [shape = 's32[1]{0}', space=sflag, size = 0x4, scoped, tag = 'scoped memory for normal_dist_decoder_fused.1']
    #allocation5 [shape = 'u8[4096]{0}', space=vmem, size = 0x1000, scoped, tag = 'output window, operand 0, single buffered']
    #allocation6 [shape = 'u8[4096]{0}', space=vmem, size = 0x1000, scoped, tag = 'output window, operand 1, single buffered']
    #allocation7 [shape = 's32[1]{0}', space=sflag, size = 0x4, scoped, tag = 'scoped memory for normal_dist_decoder_fused.1']
    %10 = vsyncpa [#allocation3], 0
    %11 = vsyncpa [#allocation4], 0
    %12 = vsyncpa [#allocation7], 0
    // Predicated region
    $region2: #{normal_dist_decoder_fused.1} parent=1 // pred_check
      _
    $region3: #{normal_dist_decoder_fused.1} parent=1 // pred_check_branch
      %14 = sbr.rel (0) target = $region5
    $region4: #{normal_dist_decoder_fused.1} parent=1 // pred_region
      _
    $region5: #{normal_dist_decoder_fused.1} parent=1 // pred_fallthru
      _
    // Predicated region
    $region6: #{normal_dist_decoder_fused.1} parent=1 // pred_check
      _
    $region7: #{normal_dist_decoder_fused.1} parent=1 // pred_check_branch
      %16 = sbr.rel (0) target = $region9
    $region8: #{normal_dist_decoder_fused.1} parent=1 // pred_region
      %s18 = ssub.s32 512, 512
      %19 = vsyncadd [#allocation3], %s18
      %s20 = sshll.u32 [#allocation2], 4
      %s21 = int_to_ptr.vmem [resolvable:$true] %s20
      %26 = dma.hbm_to_vmem [thread:$0]  %s1, 512, %s21, [#allocation3], 128, 128, 8
    $region9: #{normal_dist_decoder_fused.1} parent=1 // pred_fallthru
      _
    // Predicated region
    $region10: #{normal_dist_decoder_fused.1} parent=1 // pred_check
      _
    $region11: #{normal_dist_decoder_fused.1} parent=1 // pred_check_branch
      %28 = sbr.rel (0) target = $region13
    $region12: #{normal_dist_decoder_fused.1} parent=1 // pred_region
      _
    $region13: #{normal_dist_decoder_fused.1} parent=1 // pred_fallthru
      _
    // Predicated region
    $region14: #{normal_dist_decoder_fused.1} parent=1 // pred_check
      _
    $region15: #{normal_dist_decoder_fused.1} parent=1 // pred_check_branch
      %30 = sbr.rel (0) target = $region17
    $region16: #{normal_dist_decoder_fused.1} parent=1 // pred_region
      %31 = dma.done [#allocation3], 512
    $region17: #{normal_dist_decoder_fused.1} parent=1 // pred_fallthru
      _
    %v33 = vld [vmem:[%s0] sm:$0xf]
    %v34 = vld [vmem:[#allocation2] sm:$0xff]
    %v35 = vld [vmem:[#allocation2 + $0x8] sm:$0xff]
    %v36 = vld [vmem:[#allocation2 + $0x10] sm:$0xff]
    %v37 = vld [vmem:[#allocation2 + $0x18] sm:$0xff]
    %v38 = vld [vmem:[%s2] sm:$0x3]
    %v40 = vlaneseq
    %v41 = vshrl.u32 %v40, 7
    %v42 = vsub.s32 0, %v41
    %v43 = vrot.slane %v38, %v42
    %v44 = vlaneseq
    %v45 = vshrl.u32 %v44, 7
    %v46 = vsub.s32 1, %v45
    %v47 = vrot.slane %v38, %v46
    %v54 = vunpack.c.l.b16 %v34
    %v55 = vunpack.c.h.b16 %v34
    %v56 = vunpack.c.l.b16 %v35
    %v57 = vunpack.c.h.b16 %v35
    %v58 = vunpack.c.l.b16 %v36
    %v59 = vunpack.c.h.b16 %v36
    %v60 = vunpack.c.l.b16 %v37
    %v61 = vunpack.c.h.b16 %v37
    %v62 = vpack.c.b16 %v56, %v54
    %v63 = vpack.c.b16 %v57, %v55
    %v64 = vpack.c.b16 %v60, %v58
    %v65 = vpack.c.b16 %v61, %v59
    %vm70 = vcmask 261120
    %v72 = vsel %vm70, %v33, 0
    %74 = vmatprep.subr.bf16.mxu0 %v63
    %75 = vmatpush1.bf16.msra.mxu0 %v62
    %76 = vmatprep.subr.bf16.mxu0 %v65
    %77 = vmatpush1.bf16.msra.mxu0 %v64
    %78 = vmatprep.subr.bf16.mxu0 0
    %79 = vmatpush1.bf16.msra.mxu0 0
    %80 = vmatprep.subr.bf16.mxu0 0
    %81 = vmatpush1.bf16.msra.mxu0 0
    %82 = vmatprep.subr.bf16.mxu0 0
    %83 = vmatpush1.bf16.msra.mxu0 0
    %84 = vmatprep.subr.bf16.mxu0 0
    %85 = vmatpush1.bf16.msra.mxu0 0
    %86 = vmatprep.subr.bf16.mxu0 0
    %87 = vmatpush1.bf16.msra.mxu0 0
    %88 = vmatprep.subr.bf16.mxu0 0
    %89 = vmatpush1.bf16.msra.mxu0 0
    %90 = vmatprep.subr.bf16.mxu0 0
    %91 = vmatpush1.bf16.msra.mxu0 0
    %92 = vmatprep.subr.bf16.mxu0 0
    %93 = vmatpush1.bf16.msra.mxu0 0
    %94 = vmatprep.subr.bf16.mxu0 0
    %95 = vmatpush1.bf16.msra.mxu0 0
    %96 = vmatprep.subr.bf16.mxu0 0
    %97 = vmatpush1.bf16.msra.mxu0 0
    %98 = vmatprep.subr.bf16.mxu0 0
    %99 = vmatpush1.bf16.msra.mxu0 0
    %100 = vmatprep.subr.bf16.mxu0 0
    %101 = vmatpush1.bf16.msra.mxu0 0
    %102 = vmatprep.subr.bf16.mxu0 0
    %103 = vmatpush1.bf16.msra.mxu0 0
    %104 = vmatprep.subr.bf16.mxu0 0
    %105 = vmatpush1.bf16.msra.mxu0 0
    %106 = vmatprep.mubr.bf16.mxu0 0
    %107 = vmatmul.mubr.bf16.gmra.mrb[0].mxu0 %v72
    %v108 = vpop.f32.mrb[0].mxu0
    %v109 = vadd.f32 %v43, %v108
    %v110 = vpop.f32.mrb[0].mxu0
    %v111 = vadd.f32 %v47, %v110
    %v112 = vpop.f32.mrb[0].mxu0
    %v113 = vpop.f32.mrb[0].mxu0
    %114 = vdwg.mxu0
    %v115 = vmax.f32 %v111, 0.0
    %v116 = vand.u32 2147483647, %v111
    %v117 = vsub.f32 0.0, %v116
    %v118 = vmul.f32 %v117, 1.442695
    %v119 = vpow.pop %v118
    %v120 = vadd.f32 %v119, 1.0
    %v121 = vlog2.pop %v120
    %v122 = vmul.f32 %v121, 0.6931472
    %v123 = vmul.f32 -0.5, %v119
    %v124 = vadd.f32 %v123, 1.0
    %v125 = vmul.f32 %v124, %v119
    %v126 = vand.u32 2147483647, %v119
    %vm127 = vcmp.lt.f32.partialorder %v126, 0.0004427343
    %v128 = vsel %vm127, %v125, %v122
    %v129 = vadd.f32 %v115, %v128
    %v130 = vmax.f32 %v129, 1.1754944e-38
    %vm131 = vcmask 130048
    %132 = vst.msk [vmem:[#allocation5] sm:$0xff] %vm131, %v109
    %133 = vst.msk [vmem:[#allocation6] sm:$0xff] %vm131, %v130
    // Predicated region
    $region18: #{normal_dist_decoder_fused.1} parent=1 // pred_check
      _
    $region19: #{normal_dist_decoder_fused.1} parent=1 // pred_check_branch
      %135 = sbr.rel (0) target = $region21
    $region20: #{normal_dist_decoder_fused.1} parent=1 // pred_region
      %s137 = ssub.s32 128, 128
      %138 = vsyncadd [#allocation4], %s137
      %s140 = sshll.u32 [#allocation5], 4
      %s141 = int_to_ptr.vmem [resolvable:$true] %s140
      %143 = dma.vmem_to_hbm [thread:$0]  %s141, 128, %s3, [#allocation4]
    $region21: #{normal_dist_decoder_fused.1} parent=1 // pred_fallthru
      _
    // Predicated region
    $region22: #{normal_dist_decoder_fused.1} parent=1 // pred_check
      _
    $region23: #{normal_dist_decoder_fused.1} parent=1 // pred_check_branch
      %145 = sbr.rel (0) target = $region25
    $region24: #{normal_dist_decoder_fused.1} parent=1 // pred_region
      %s147 = ssub.s32 128, 128
      %148 = vsyncadd [#allocation7], %s147
      %s150 = sshll.u32 [#allocation6], 4
      %s151 = int_to_ptr.vmem [resolvable:$true] %s150
      %153 = dma.vmem_to_hbm [thread:$0]  %s151, 128, %s4, [#allocation7]
    $region25: #{normal_dist_decoder_fused.1} parent=1 // pred_fallthru
      _
    // Predicated region
    $region26: #{normal_dist_decoder_fused.1} parent=1 // pred_check
      _
    $region27: #{normal_dist_decoder_fused.1} parent=1 // pred_check_branch
      %155 = sbr.rel (0) target = $region29
    $region28: #{normal_dist_decoder_fused.1} parent=1 // pred_region
      %156 = dma.done [#allocation4], 128
    $region29: #{normal_dist_decoder_fused.1} parent=1 // pred_fallthru
      _
    // Predicated region
    $region30: #{normal_dist_decoder_fused.1} parent=1 // pred_check
      _
    $region31: #{normal_dist_decoder_fused.1} parent=1 // pred_check_branch
      %158 = sbr.rel (0) target = $region33
    $region32: #{normal_dist_decoder_fused.1} parent=1 // pred_region
      %159 = dma.done [#allocation7], 128
    $region33: #{normal_dist_decoder_fused.1} parent=1 // pred_fallthru
      _
    %160 = vsyncpa [#allocation3], 1
    %161 = vsyncpa [#allocation4], 1
    %162 = vsyncpa [#allocation7], 1

</llo_original>
